<compile_context>
chip_gen: v6e
topology: v6e:2x2x1
jax: 0.10.0
libtpu: 0.0.40
codegen_flags: <defaults>
</compile_context>

<pallas_src>
import functools

import jax
import jax.numpy as jnp
from jax.experimental import pallas as pl

LANE = 128
SUBLANE = 8


def _round_up(x, m):
    return ((x + m - 1) // m) * m


# --------------------------------------------------------------------------- kernel
def _fused_gnn_kernel(
    cen_ref,      # (8, Dp)        f32, 8 identical rows = initial center
    ctx_ref,      # (Np, Dp)       f32, initial context (zero padded)
    mask_ref,     # (Np, 1)        f32, 1.0 for real context rows
    w_att_ref,    # (L, 2*Dp, Ep)  bf16 fused attention weight (features + score lane)
    b_att_ref,    # (L, 1, Ep)     f32
    w_upd_ref,    # (L, Dp+Ep, Dp) bf16 fused shared node-updator weight
    b_upd_ref,    # (L, 1, Dp)     f32
    cen_out_ref,  # (8, Dp)        f32
    ctx_out_ref,  # (Np, Dp)       f32
    *,
    score_lane: int,
    inv_n: float,
):
    num_layers = w_att_ref.shape[0]
    center = cen_ref[...]                    # (8, Dp)   f32
    context = ctx_ref[...]                   # (Np, Dp)  f32
    mask = mask_ref[...]                     # (Np, 1)   f32
    n_pad, d_pad = context.shape
    e_pad = w_att_ref.shape[2]

    for l in range(num_layers):              # static unroll: num_layers is small
        w_att = w_att_ref[l]                 # (2*Dp, Ep) bf16
        b_att = b_att_ref[l]                 # (1, Ep)    f32
        w_upd = w_upd_ref[l]                 # (Dp+Ep, Dp) bf16
        b_upd = b_upd_ref[l]                 # (1, Dp)    f32

        # ---- NodeAttention: one fused matmul gives edge features AND the score lane
        if n_pad == SUBLANE:
            cen_rows = center
        else:
            cen_rows = jnp.broadcast_to(center[0:1], (n_pad, d_pad))
        att_in = jnp.concatenate([context, cen_rows], axis=1).astype(jnp.bfloat16)
        att = jnp.dot(att_in, w_att, preferred_element_type=jnp.float32) + b_att   # (Np, Ep)

        # static lane slice for the score column
        scores = att[:, score_lane:score_lane + 1]                                  # (Np, 1)
        scores = jnp.where(mask > 0.0, scores, -1e30)                               # mask pad rows
        m = jnp.max(scores, axis=0, keepdims=True)
        ex = jnp.exp(scores - m) * mask
        alpha = ex * pl.reciprocal(jnp.sum(ex, axis=0, keepdims=True), approx=True)
        # Lanes >= edge_dim (incl. the score lane) carry junk; the matching w_upd rows
        # are zero-packed so they never contribute downstream.
        edges = alpha * jnp.maximum(att, 0.0)                                       # (Np, Ep)
        mean_e = jnp.sum(edges, axis=0, keepdims=True) * inv_n                      # (1, Ep)

        # ---- shared context/center updator: one fused matmul for all rows
        upd_in = jnp.concatenate(
            [
                jnp.concatenate([context, edges], axis=1),                          # (Np, Dp+Ep)
                jnp.concatenate([center,                                            # (8,  Dp+Ep)
                                 jnp.broadcast_to(mean_e, (SUBLANE, e_pad))], axis=1),
            ],
            axis=0,
        ).astype(jnp.bfloat16)
        upd = jnp.maximum(
            jnp.dot(upd_in, w_upd, preferred_element_type=jnp.float32) + b_upd, 0.0)

        # context: residual; padded rows re-zeroed so the carry stays clean.
        context = (upd[:n_pad, :] + context) * mask
        # center: the 8 appended rows are identical -> new 8-row center block, no residual.
        center = upd[n_pad:n_pad + SUBLANE, :]

    cen_out_ref[...] = center
    ctx_out_ref[...] = context


# --------------------------------------------------------------------------- packing
def _pack_layer(params, d_pad, e_pad):
    """Pad + fuse one layer's (in, out)-major weights into MXU-friendly blocks."""
    wa_c, wa_x, ba = params["wa_c"], params["wa_x"], params["ba"]
    ws_c, ws_x, bs = params["ws_c"], params["ws_x"], params["bs"]
    wu_x, wu_e, bu = params["wu_x"], params["wu_e"], params["bu"]
    cc, e = wa_c.shape
    cx = wa_x.shape[0]
    do = wu_x.shape[1]
    score = e_pad - 1   # fixed score lane (edge_dim <= e_pad - 1 always)

    # Attention: rows [0,Dp) act on context, rows [Dp,2Dp) on center; features in
    # columns [0,e), score weights in the last column.
    w_att = jnp.zeros((2 * d_pad, e_pad), jnp.float32)
    w_att = w_att.at[:cx, :e].set(wa_x)
    w_att = w_att.at[:cx, score:score + 1].set(ws_x)
    w_att = w_att.at[d_pad:d_pad + cc, :e].set(wa_c)
    w_att = w_att.at[d_pad:d_pad + cc, score:score + 1].set(ws_c)
    b_att = jnp.zeros((1, e_pad), jnp.float32)
    b_att = b_att.at[:, :e].set(ba)
    b_att = b_att.at[:, score:score + 1].set(bs)

    # Shared updator: rows [0,Dp) take node features, rows [Dp,Dp+Ep) take edges.
    w_upd = jnp.zeros((d_pad + e_pad, d_pad), jnp.float32)
    w_upd = w_upd.at[:cx, :do].set(wu_x)
    w_upd = w_upd.at[d_pad:d_pad + e, :do].set(wu_e)
    b_upd = jnp.zeros((1, d_pad), jnp.float32)
    b_upd = b_upd.at[:, :do].set(bu)
    return w_att, b_att, w_upd, b_upd


# --------------------------------------------------------------------------- wrapper
def multi_layer_hetero_gnn(center, context, layer_params):
    """MultiLayerHeteroGnn forward.  center: (Cc,), context: (N, Cx)."""
    n, cx0 = context.shape
    cc0 = center.shape[0]
    assert n > 0, "empty context graph is not supported"
    do_last = layer_params[-1]["wu_x"].shape[1]

    # Document/enforce the module's implicit requirements: the residual and the
    # shared (context) updator applied to the center require equal node dims.
    cur_c, cur_x = cc0, cx0
    for p in layer_params:
        out_x = p["wu_x"].shape[1]
        assert p["wu_x"].shape[0] == cur_x and out_x == cur_x, \
            "residual carry requires out_context_dim == in_context_dim"
        assert cur_c == cur_x, \
            "center update reuses the context updator: requires in_center == in_context"
        cur_c, cur_x = out_x, out_x

    node_dims = [cc0, cx0] + [p["wu_x"].shape[1] for p in layer_params]
    d_pad = _round_up(max(node_dims), LANE)
    e_pad = _round_up(max(p["wa_x"].shape[1] for p in layer_params) + 1, LANE)
    n_pad = _round_up(n, SUBLANE)

    packed = [_pack_layer(p, d_pad, e_pad) for p in layer_params]
    w_att = jnp.stack([q[0] for q in packed]).astype(jnp.bfloat16)   # (L, 2*Dp, Ep)
    b_att = jnp.stack([q[1] for q in packed])                        # (L, 1, Ep)
    w_upd = jnp.stack([q[2] for q in packed]).astype(jnp.bfloat16)   # (L, Dp+Ep, Dp)
    b_upd = jnp.stack([q[3] for q in packed])                        # (L, 1, Dp)

    cen_row = jnp.zeros((1, d_pad), jnp.float32).at[0, :cc0].set(center)
    cen_p = jnp.tile(cen_row, (SUBLANE, 1))                          # 8 identical rows
    ctx_p = jnp.zeros((n_pad, d_pad), jnp.float32).at[:n, :cx0].set(context)
    row_mask = (jnp.arange(n_pad) < n).astype(jnp.float32)[:, None]  # (Np, 1)

    kernel = functools.partial(
        _fused_gnn_kernel, score_lane=e_pad - 1, inv_n=1.0 / float(n))

    # No grid: every operand is a whole-array VMEM block (weights ~hundreds of KiB
    # here); the layer loop is unrolled inside the kernel.
    cen_o, ctx_o = pl.pallas_call(
        kernel,
        out_shape=(
            jax.ShapeDtypeStruct((SUBLANE, d_pad), jnp.float32),
            jax.ShapeDtypeStruct((n_pad, d_pad), jnp.float32),
        ),
    )(cen_p, ctx_p, row_mask, w_att, b_att, w_upd, b_upd)

    return cen_o[0, :do_last], ctx_o[:n, :do_last]


# --------------------------------------------------------------------------- reference
def _reference_forward(center, context, layer_params):
    """Pure-JAX f32 reference of the same forward pass (same NodeAttention formulation)."""
    hi = jax.lax.Precision.HIGHEST

    def dot(a, b):
        return jnp.dot(a, b, precision=hi)

    for p in layer_params:
        feat = jnp.maximum(
            dot(context, p["wa_x"]) + dot(center[None, :], p["wa_c"]) + p["ba"], 0.0)
        scores = dot(context, p["ws_x"]) + dot(center[None, :], p["ws_c"]) + p["bs"]
        alpha = jax.nn.softmax(scores, axis=0)
        edges = alpha * feat
        new_context = jnp.maximum(
            dot(context, p["wu_x"]) + dot(edges, p["wu_e"]) + p["bu"], 0.0) + context
        mean_e = jnp.mean(edges, axis=0, keepdims=True)
        new_center = jnp.maximum(
            dot(center[None, :], p["wu_x"]) + dot(mean_e, p["wu_e"]) + p["bu"], 0.0)[0]
        center, context = new_center, new_context
    return center, context


# --------------------------------------------------------------------------- params
def init_layer_params(key, in_center, in_context, out_context, edge_dim):
    """Deterministic synthetic parameters.  Linear weights kept as (in, out)."""
    ks = jax.random.split(key, 8)
    scale_att = 1.0 / jnp.sqrt(jnp.float32(in_center + in_context))
    scale_upd = 1.0 / jnp.sqrt(jnp.float32(in_context + edge_dim))
    return {
        "wa_c": jax.random.normal(ks[0], (in_center, edge_dim), jnp.float32) * scale_att,
        "wa_x": jax.random.normal(ks[1], (in_context, edge_dim), jnp.float32) * scale_att,
        "ba": jax.random.normal(ks[2], (1, edge_dim), jnp.float32) * 0.01,
        "ws_c": jax.random.normal(ks[3], (in_center, 1), jnp.float32) * scale_att,
        "ws_x": jax.random.normal(ks[4], (in_context, 1), jnp.float32) * scale_att,
        "bs": jax.random.normal(ks[5], (1, 1), jnp.float32) * 0.01,
        "wu_x": jax.random.normal(ks[6], (in_context, out_context), jnp.float32) * scale_upd,
        "wu_e": jax.random.normal(ks[7], (edge_dim, out_context), jnp.float32) * scale_upd,
        "bu": jnp.zeros((1, out_context), jnp.float32),
    }


# --------------------------------------------------------------------------- main
if __name__ == "__main__":
    # MultiLayerHeteroGnn(node_dims, edge_dims, activation=ReLU)
    node_dims = [(32, 32), (32, 32), (32, 32)]
    edge_dims = [32, 32]
    N = 8  # number of context nodes

    key = jax.random.PRNGKey(0)
    k_center, k_context, k_params = jax.random.split(key, 3)
    center = jax.random.normal(k_center, (node_dims[0][0],), jnp.float32)
    context = jax.random.normal(k_context, (N, node_dims[0][1]), jnp.float32)

    layer_keys = jax.random.split(k_params, len(edge_dims))
    layer_params = []
    for (in_c, in_x), (out_c, out_x), e_dim, lk in zip(
        node_dims[:-1], node_dims[1:], edge_dims, layer_keys
    ):
        layer_params.append(init_layer_params(lk, in_c, in_x, out_x, e_dim))

    fwd = jax.jit(functools.partial(multi_layer_hetero_gnn,
                                    layer_params=tuple(layer_params)))
    out_center, out_context = fwd(center, context)
    jax.block_until_ready((out_center, out_context))

    ref_center, ref_context = _reference_forward(center, context, layer_params)

    assert out_center.shape == (node_dims[-1][1],)
    assert out_context.shape == (N, node_dims[-1][1])
    # bf16 MXU operands vs. an f32-HIGHEST reference: ~1e-2 worst-case drift.
    assert bool(jnp.allclose(out_center, ref_center, atol=3e-2, rtol=3e-2))
    assert bool(jnp.allclose(out_context, ref_context, atol=3e-2, rtol=3e-2))
    print("KERNEL_OK")
</pallas_src>

<mosaic_0001>
module attributes {stable_mosaic.version = 11 : i64} {
  func.func @_fused_gnn_kernel(%arg0: memref<8x128xf32, #tpu.memory_space<vmem>>, %arg1: memref<8x128xf32, #tpu.memory_space<vmem>>, %arg2: memref<8x1xf32, #tpu.memory_space<vmem>>, %arg3: memref<2x256x128xbf16, #tpu.memory_space<vmem>>, %arg4: memref<2x1x128xf32, #tpu.memory_space<vmem>>, %arg5: memref<2x256x128xbf16, #tpu.memory_space<vmem>>, %arg6: memref<2x1x128xf32, #tpu.memory_space<vmem>>, %arg7: memref<8x128xf32, #tpu.memory_space<vmem>>, %arg8: memref<8x128xf32, #tpu.memory_space<vmem>>) attributes {dimension_semantics = [], scalar_prefetch = 0 : i64, scratch_operands = 0 : i64, tpu.core_type = #tpu.core_type<tc>} {
    %c0 = arith.constant 0 : index
    %c0_0 = arith.constant 0 : index
    %0 = vector.load %arg0[%c0, %c0_0] : memref<8x128xf32, #tpu.memory_space<vmem>>, vector<8x128xf32>
    %c0_1 = arith.constant 0 : index
    %c0_2 = arith.constant 0 : index
    %1 = vector.load %arg1[%c0_1, %c0_2] : memref<8x128xf32, #tpu.memory_space<vmem>>, vector<8x128xf32>
    %c0_3 = arith.constant 0 : index
    %c0_4 = arith.constant 0 : index
    %2 = vector.load %arg2[%c0_3, %c0_4] : memref<8x1xf32, #tpu.memory_space<vmem>>, vector<8x1xf32>
    %c0_5 = arith.constant 0 : index
    %c0_6 = arith.constant 0 : index
    %c0_7 = arith.constant 0 : index
    %3 = vector.load %arg3[%c0_5, %c0_6, %c0_7] : memref<2x256x128xbf16, #tpu.memory_space<vmem>>, vector<1x256x128xbf16>
    %4 = vector.shape_cast %3 : vector<1x256x128xbf16> to vector<256x128xbf16>
    %c0_8 = arith.constant 0 : index
    %c0_9 = arith.constant 0 : index
    %c0_10 = arith.constant 0 : index
    %5 = vector.load %arg4[%c0_8, %c0_9, %c0_10] : memref<2x1x128xf32, #tpu.memory_space<vmem>>, vector<1x1x128xf32>
    %6 = vector.shape_cast %5 : vector<1x1x128xf32> to vector<1x128xf32>
    %c0_11 = arith.constant 0 : index
    %c0_12 = arith.constant 0 : index
    %c0_13 = arith.constant 0 : index
    %7 = vector.load %arg5[%c0_11, %c0_12, %c0_13] : memref<2x256x128xbf16, #tpu.memory_space<vmem>>, vector<1x256x128xbf16>
    %8 = vector.shape_cast %7 : vector<1x256x128xbf16> to vector<256x128xbf16>
    %c0_14 = arith.constant 0 : index
    %c0_15 = arith.constant 0 : index
    %c0_16 = arith.constant 0 : index
    %9 = vector.load %arg6[%c0_14, %c0_15, %c0_16] : memref<2x1x128xf32, #tpu.memory_space<vmem>>, vector<1x1x128xf32>
    %10 = vector.shape_cast %9 : vector<1x1x128xf32> to vector<1x128xf32>
    %11 = tpu.concatenate %1, %0 in 1 : vector<8x128xf32>, vector<8x128xf32> -> vector<8x256xf32>
    %12 = arith.truncf %11 : vector<8x256xf32> to vector<8x256xbf16>
    %cst = arith.constant dense<0.000000e+00> : vector<8x128xf32>
    %13 = tpu.matmul %12, %4, %cst {dimension_numbers = #tpu.dot_dimension_numbers<[1], [0], [0], [1], [0, 0, 1, 1], [], []>} : vector<8x256xbf16>, vector<256x128xbf16>, vector<8x128xf32> -> vector<8x128xf32>
    %14 = vector.broadcast %6 : vector<1x128xf32> to vector<8x128xf32>
    %15 = arith.addf %13, %14 : vector<8x128xf32>
    %16 = vector.extract_strided_slice %15 {offsets = [0, 127], sizes = [8, 1], strides = [1, 1]} : vector<8x128xf32> to vector<8x1xf32>
    %cst_17 = arith.constant 0.000000e+00 : f32
    %17 = vector.broadcast %cst_17 : f32 to vector<8x1xf32>
    %18 = arith.cmpf ogt, %2, %17 : vector<8x1xf32>
    %cst_18 = arith.constant -1.000000e+30 : f32
    %19 = vector.broadcast %cst_18 : f32 to vector<8x1xf32>
    %20 = arith.select %18, %16, %19 : vector<8x1xi1>, vector<8x1xf32>
    %cst_19 = arith.constant dense<0xFF800000> : vector<1xf32>
    %21 = vector.multi_reduction <maximumf>, %20, %cst_19 [0] : vector<8x1xf32> to vector<1xf32>
    %22 = vector.shape_cast %21 : vector<1xf32> to vector<1x1xf32>
    %23 = vector.broadcast %22 : vector<1x1xf32> to vector<8x1xf32>
    %24 = arith.subf %20, %23 : vector<8x1xf32>
    %25 = math.exp %24 : vector<8x1xf32>
    %26 = arith.mulf %25, %2 : vector<8x1xf32>
    %cst_20 = arith.constant dense<0.000000e+00> : vector<1xf32>
    %27 = vector.multi_reduction <add>, %26, %cst_20 [0] : vector<8x1xf32> to vector<1xf32>
    %28 = vector.shape_cast %27 : vector<1xf32> to vector<1x1xf32>
    %29 = tpu.reciprocal %28 {approx = true} : vector<1x1xf32> -> vector<1x1xf32>
    %30 = vector.broadcast %29 : vector<1x1xf32> to vector<8x1xf32>
    %31 = arith.mulf %26, %30 : vector<8x1xf32>
    %cst_21 = arith.constant 0.000000e+00 : f32
    %32 = vector.broadcast %cst_21 : f32 to vector<8x128xf32>
    %33 = arith.maximumf %15, %32 : vector<8x128xf32>
    %34 = vector.broadcast %31 : vector<8x1xf32> to vector<8x128xf32>
    %35 = arith.mulf %34, %33 : vector<8x128xf32>
    %cst_22 = arith.constant dense<0.000000e+00> : vector<128xf32>
    %36 = vector.multi_reduction <add>, %35, %cst_22 [0] : vector<8x128xf32> to vector<128xf32>
    %37 = vector.shape_cast %36 : vector<128xf32> to vector<1x128xf32>
    %cst_23 = arith.constant 1.250000e-01 : f32
    %38 = vector.broadcast %cst_23 : f32 to vector<1x128xf32>
    %39 = arith.mulf %37, %38 : vector<1x128xf32>
    %40 = tpu.concatenate %1, %35 in 1 : vector<8x128xf32>, vector<8x128xf32> -> vector<8x256xf32>
    %41 = vector.shape_cast %39 : vector<1x128xf32> to vector<1x128xf32>
    %42 = vector.broadcast %41 : vector<1x128xf32> to vector<8x128xf32>
    %43 = tpu.concatenate %0, %42 in 1 : vector<8x128xf32>, vector<8x128xf32> -> vector<8x256xf32>
    %44 = tpu.concatenate %40, %43 in 0 : vector<8x256xf32>, vector<8x256xf32> -> vector<16x256xf32>
    %45 = arith.truncf %44 : vector<16x256xf32> to vector<16x256xbf16>
    %cst_24 = arith.constant dense<0.000000e+00> : vector<16x128xf32>
    %46 = tpu.matmul %45, %8, %cst_24 {dimension_numbers = #tpu.dot_dimension_numbers<[1], [0], [0], [1], [0, 0, 1, 1], [], []>} : vector<16x256xbf16>, vector<256x128xbf16>, vector<16x128xf32> -> vector<16x128xf32>
    %47 = vector.broadcast %10 : vector<1x128xf32> to vector<16x128xf32>
    %48 = arith.addf %46, %47 : vector<16x128xf32>
    %cst_25 = arith.constant 0.000000e+00 : f32
    %49 = vector.broadcast %cst_25 : f32 to vector<16x128xf32>
    %50 = arith.maximumf %48, %49 : vector<16x128xf32>
    %51 = vector.extract_strided_slice %50 {offsets = [0, 0], sizes = [8, 128], strides = [1, 1]} : vector<16x128xf32> to vector<8x128xf32>
    %52 = arith.addf %51, %1 : vector<8x128xf32>
    %53 = vector.broadcast %2 : vector<8x1xf32> to vector<8x128xf32>
    %54 = arith.mulf %52, %53 : vector<8x128xf32>
    %55 = vector.extract_strided_slice %50 {offsets = [8, 0], sizes = [8, 128], strides = [1, 1]} : vector<16x128xf32> to vector<8x128xf32>
    %c1 = arith.constant 1 : index
    %c0_26 = arith.constant 0 : index
    %c0_27 = arith.constant 0 : index
    %56 = vector.load %arg3[%c1, %c0_26, %c0_27] : memref<2x256x128xbf16, #tpu.memory_space<vmem>>, vector<1x256x128xbf16>
    %57 = vector.shape_cast %56 : vector<1x256x128xbf16> to vector<256x128xbf16>
    %c1_28 = arith.constant 1 : index
    %c0_29 = arith.constant 0 : index
    %c0_30 = arith.constant 0 : index
    %58 = vector.load %arg4[%c1_28, %c0_29, %c0_30] : memref<2x1x128xf32, #tpu.memory_space<vmem>>, vector<1x1x128xf32>
    %59 = vector.shape_cast %58 : vector<1x1x128xf32> to vector<1x128xf32>
    %c1_31 = arith.constant 1 : index
    %c0_32 = arith.constant 0 : index
    %c0_33 = arith.constant 0 : index
    %60 = vector.load %arg5[%c1_31, %c0_32, %c0_33] : memref<2x256x128xbf16, #tpu.memory_space<vmem>>, vector<1x256x128xbf16>
    %61 = vector.shape_cast %60 : vector<1x256x128xbf16> to vector<256x128xbf16>
    %c1_34 = arith.constant 1 : index
    %c0_35 = arith.constant 0 : index
    %c0_36 = arith.constant 0 : index
    %62 = vector.load %arg6[%c1_34, %c0_35, %c0_36] : memref<2x1x128xf32, #tpu.memory_space<vmem>>, vector<1x1x128xf32>
    %63 = vector.shape_cast %62 : vector<1x1x128xf32> to vector<1x128xf32>
    %64 = tpu.concatenate %54, %55 in 1 : vector<8x128xf32>, vector<8x128xf32> -> vector<8x256xf32>
    %65 = arith.truncf %64 : vector<8x256xf32> to vector<8x256xbf16>
    %cst_37 = arith.constant dense<0.000000e+00> : vector<8x128xf32>
    %66 = tpu.matmul %65, %57, %cst_37 {dimension_numbers = #tpu.dot_dimension_numbers<[1], [0], [0], [1], [0, 0, 1, 1], [], []>} : vector<8x256xbf16>, vector<256x128xbf16>, vector<8x128xf32> -> vector<8x128xf32>
    %67 = vector.broadcast %59 : vector<1x128xf32> to vector<8x128xf32>
    %68 = arith.addf %66, %67 : vector<8x128xf32>
    %69 = vector.extract_strided_slice %68 {offsets = [0, 127], sizes = [8, 1], strides = [1, 1]} : vector<8x128xf32> to vector<8x1xf32>
    %cst_38 = arith.constant 0.000000e+00 : f32
    %70 = vector.broadcast %cst_38 : f32 to vector<8x1xf32>
    %71 = arith.cmpf ogt, %2, %70 : vector<8x1xf32>
    %cst_39 = arith.constant -1.000000e+30 : f32
    %72 = vector.broadcast %cst_39 : f32 to vector<8x1xf32>
    %73 = arith.select %71, %69, %72 : vector<8x1xi1>, vector<8x1xf32>
    %cst_40 = arith.constant dense<0xFF800000> : vector<1xf32>
    %74 = vector.multi_reduction <maximumf>, %73, %cst_40 [0] : vector<8x1xf32> to vector<1xf32>
    %75 = vector.shape_cast %74 : vector<1xf32> to vector<1x1xf32>
    %76 = vector.broadcast %75 : vector<1x1xf32> to vector<8x1xf32>
    %77 = arith.subf %73, %76 : vector<8x1xf32>
    %78 = math.exp %77 : vector<8x1xf32>
    %79 = arith.mulf %78, %2 : vector<8x1xf32>
    %cst_41 = arith.constant dense<0.000000e+00> : vector<1xf32>
    %80 = vector.multi_reduction <add>, %79, %cst_41 [0] : vector<8x1xf32> to vector<1xf32>
    %81 = vector.shape_cast %80 : vector<1xf32> to vector<1x1xf32>
    %82 = tpu.reciprocal %81 {approx = true} : vector<1x1xf32> -> vector<1x1xf32>
    %83 = vector.broadcast %82 : vector<1x1xf32> to vector<8x1xf32>
    %84 = arith.mulf %79, %83 : vector<8x1xf32>
    %cst_42 = arith.constant 0.000000e+00 : f32
    %85 = vector.broadcast %cst_42 : f32 to vector<8x128xf32>
    %86 = arith.maximumf %68, %85 : vector<8x128xf32>
    %87 = vector.broadcast %84 : vector<8x1xf32> to vector<8x128xf32>
    %88 = arith.mulf %87, %86 : vector<8x128xf32>
    %cst_43 = arith.constant dense<0.000000e+00> : vector<128xf32>
    %89 = vector.multi_reduction <add>, %88, %cst_43 [0] : vector<8x128xf32> to vector<128xf32>
    %90 = vector.shape_cast %89 : vector<128xf32> to vector<1x128xf32>
    %cst_44 = arith.constant 1.250000e-01 : f32
    %91 = vector.broadcast %cst_44 : f32 to vector<1x128xf32>
    %92 = arith.mulf %90, %91 : vector<1x128xf32>
    %93 = tpu.concatenate %54, %88 in 1 : vector<8x128xf32>, vector<8x128xf32> -> vector<8x256xf32>
    %94 = vector.shape_cast %92 : vector<1x128xf32> to vector<1x128xf32>
    %95 = vector.broadcast %94 : vector<1x128xf32> to vector<8x128xf32>
    %96 = tpu.concatenate %55, %95 in 1 : vector<8x128xf32>, vector<8x128xf32> -> vector<8x256xf32>
    %97 = tpu.concatenate %93, %96 in 0 : vector<8x256xf32>, vector<8x256xf32> -> vector<16x256xf32>
    %98 = arith.truncf %97 : vector<16x256xf32> to vector<16x256xbf16>
    %cst_45 = arith.constant dense<0.000000e+00> : vector<16x128xf32>
    %99 = tpu.matmul %98, %61, %cst_45 {dimension_numbers = #tpu.dot_dimension_numbers<[1], [0], [0], [1], [0, 0, 1, 1], [], []>} : vector<16x256xbf16>, vector<256x128xbf16>, vector<16x128xf32> -> vector<16x128xf32>
    %100 = vector.broadcast %63 : vector<1x128xf32> to vector<16x128xf32>
    %101 = arith.addf %99, %100 : vector<16x128xf32>
    %cst_46 = arith.constant 0.000000e+00 : f32
    %102 = vector.broadcast %cst_46 : f32 to vector<16x128xf32>
    %103 = arith.maximumf %101, %102 : vector<16x128xf32>
    %104 = vector.extract_strided_slice %103 {offsets = [0, 0], sizes = [8, 128], strides = [1, 1]} : vector<16x128xf32> to vector<8x128xf32>
    %105 = arith.addf %104, %54 : vector<8x128xf32>
    %106 = vector.broadcast %2 : vector<8x1xf32> to vector<8x128xf32>
    %107 = arith.mulf %105, %106 : vector<8x128xf32>
    %108 = vector.extract_strided_slice %103 {offsets = [8, 0], sizes = [8, 128], strides = [1, 1]} : vector<16x128xf32> to vector<8x128xf32>
    %c0_47 = arith.constant 0 : index
    %c0_48 = arith.constant 0 : index
    %109 = vector.load %arg7[%c0_47, %c0_48] : memref<8x128xf32, #tpu.memory_space<vmem>>, vector<8x128xf32>
    tpu.vector_store %arg7[%c0_47, %c0_48], %108 {strides = array<i32>} : memref<8x128xf32, #tpu.memory_space<vmem>>, vector<8x128xf32>,
    %c0_49 = arith.constant 0 : index
    %c0_50 = arith.constant 0 : index
    %110 = vector.load %arg8[%c0_49, %c0_50] : memref<8x128xf32, #tpu.memory_space<vmem>>, vector<8x128xf32>
    tpu.vector_store %arg8[%c0_49, %c0_50], %107 {strides = array<i32>} : memref<8x128xf32, #tpu.memory_space<vmem>>, vector<8x128xf32>,
    return
  }
}

</mosaic_0001>

<llo_original>
// kernel: multi_layer_hetero_gnn.1
$region0: #{multi_layer_hetero_gnn.1}
  #allocation0 [shape = 'u32[]', space=smem, size = 0x4, offset = 0x4, fixed_abs, tag = 'smem constant byte address 0x4 - core index']
  #allocation1 [shape = 'u32[144,128]{1,0:T(1,128)}', space=vmem, size = 0x12000, scoped, tag = 'internal scratch']
  %s0 = inlined_call_operand.vmem [shape: f32[8,128], index: 0, kind: input, shape index: {}]
  %s1 = inlined_call_operand.vmem [shape: f32[8,128], index: 1, kind: input, shape index: {}]
  %s2 = inlined_call_operand.vmem [shape: f32[8,1], index: 2, kind: input, shape index: {}]
  %s3 = inlined_call_operand.vmem [shape: bf16[2,256,128], index: 3, kind: input, shape index: {}]
  %s4 = inlined_call_operand.vmem [shape: f32[2,1,128], index: 4, kind: input, shape index: {}]
  %s5 = inlined_call_operand.vmem [shape: bf16[2,256,128], index: 5, kind: input, shape index: {}]
  %s6 = inlined_call_operand.vmem [shape: f32[2,1,128], index: 6, kind: input, shape index: {}]
  %s7 = inlined_call_operand.vmem [shape: f32[8,128], index: 7, kind: output, shape index: {0}]
  %s8 = inlined_call_operand.hbm [shape: f32[8,128], index: 8, kind: output, shape index: {1}]
  %9 = xla_tuple %s7, %s8
  %s10 = sld [smem:[#allocation0]]
  $region46: #{multi_layer_hetero_gnn.1} parent=0
    _
  %s12 = ssub.s32 1, %s10
  %s13 = scalar_select 0, %s12, %s10
  $region1: #{multi_layer_hetero_gnn.1} parent=0
    #allocation2 [shape = 'u8[4096]{0}', space=vmem, size = 0x1000, scoped, tag = 'output window, operand 1, single buffered']
    #allocation3 [shape = 's32[1]{0}', space=sflag, size = 0x4, scoped, tag = 'scoped memory for multi_layer_hetero_gnn.1']
    %14 = vsyncpa [#allocation3], 0
    // Predicated region
    $region2: #{multi_layer_hetero_gnn.1} parent=1 // pred_check
      _
    $region3: #{multi_layer_hetero_gnn.1} parent=1 // pred_check_branch
      %16 = sbr.rel (0) target = $region5
    $region4: #{multi_layer_hetero_gnn.1} parent=1 // pred_region
      _
    $region5: #{multi_layer_hetero_gnn.1} parent=1 // pred_fallthru
      _
    // Predicated region
    $region6: #{multi_layer_hetero_gnn.1} parent=1 // pred_check
      _
    $region7: #{multi_layer_hetero_gnn.1} parent=1 // pred_check_branch
      %18 = sbr.rel (0) target = $region9
    $region8: #{multi_layer_hetero_gnn.1} parent=1 // pred_region
      _
    $region9: #{multi_layer_hetero_gnn.1} parent=1 // pred_fallthru
      _
    // Predicated region
    $region10: #{multi_layer_hetero_gnn.1} parent=1 // pred_check
      _
    $region11: #{multi_layer_hetero_gnn.1} parent=1 // pred_check_branch
      %20 = sbr.rel (0) target = $region13
    $region12: #{multi_layer_hetero_gnn.1} parent=1 // pred_region
      _
    $region13: #{multi_layer_hetero_gnn.1} parent=1 // pred_fallthru
      _
    // Predicated region
    $region14: #{multi_layer_hetero_gnn.1} parent=1 // pred_check
      _
    $region15: #{multi_layer_hetero_gnn.1} parent=1 // pred_check_branch
      %22 = sbr.rel (0) target = $region17
    $region16: #{multi_layer_hetero_gnn.1} parent=1 // pred_region
      _
    $region17: #{multi_layer_hetero_gnn.1} parent=1 // pred_fallthru
      _
    // Predicated region
    $region18: #{multi_layer_hetero_gnn.1} parent=1 // pred_check
      _
    $region19: #{multi_layer_hetero_gnn.1} parent=1 // pred_check_branch
      %24 = sbr.rel (0) target = $region21
    $region20: #{multi_layer_hetero_gnn.1} parent=1 // pred_region
      _
    $region21: #{multi_layer_hetero_gnn.1} parent=1 // pred_fallthru
      _
    // Predicated region
    $region22: #{multi_layer_hetero_gnn.1} parent=1 // pred_check
      _
    $region23: #{multi_layer_hetero_gnn.1} parent=1 // pred_check_branch
      %26 = sbr.rel (0) target = $region25
    $region24: #{multi_layer_hetero_gnn.1} parent=1 // pred_region
      _
    $region25: #{multi_layer_hetero_gnn.1} parent=1 // pred_fallthru
      _
    // Predicated region
    $region26: #{multi_layer_hetero_gnn.1} parent=1 // pred_check
      _
    $region27: #{multi_layer_hetero_gnn.1} parent=1 // pred_check_branch
      %28 = sbr.rel (0) target = $region29
    $region28: #{multi_layer_hetero_gnn.1} parent=1 // pred_region
      _
    $region29: #{multi_layer_hetero_gnn.1} parent=1 // pred_fallthru
      _
    %v30 = vld [vmem:[%s0] sm:$0xff]
    %v31 = vld [vmem:[%s1] sm:$0xff]
    %v32 = vld [vmem:[%s2] sm:$0xff]
    %v33 = vld [vmem:[%s3] sm:$0xf]
    %v34 = vld [vmem:[%s3 + $0x4] sm:$0xf]
    %v35 = vld [vmem:[%s3 + $0x8] sm:$0xf]
    %v36 = vld [vmem:[%s3 + $0xc] sm:$0xf]
    %v37 = vld [vmem:[%s3 + $0x10] sm:$0xf]
    %v38 = vld [vmem:[%s3 + $0x14] sm:$0xf]
    %v39 = vld [vmem:[%s3 + $0x18] sm:$0xf]
    %v40 = vld [vmem:[%s3 + $0x1c] sm:$0xf]
    %v41 = vld [vmem:[%s3 + $0x20] sm:$0xf]
    %v42 = vld [vmem:[%s3 + $0x24] sm:$0xf]
    %v43 = vld [vmem:[%s3 + $0x28] sm:$0xf]
    %v44 = vld [vmem:[%s3 + $0x2c] sm:$0xf]
    %v45 = vld [vmem:[%s3 + $0x30] sm:$0xf]
    %v46 = vld [vmem:[%s3 + $0x34] sm:$0xf]
    %v47 = vld [vmem:[%s3 + $0x38] sm:$0xf]
    %v48 = vld [vmem:[%s3 + $0x3c] sm:$0xf]
    %v49 = vld [vmem:[%s3 + $0x40] sm:$0xf]
    %v50 = vld [vmem:[%s3 + $0x44] sm:$0xf]
    %v51 = vld [vmem:[%s3 + $0x48] sm:$0xf]
    %v52 = vld [vmem:[%s3 + $0x4c] sm:$0xf]
    %v53 = vld [vmem:[%s3 + $0x50] sm:$0xf]
    %v54 = vld [vmem:[%s3 + $0x54] sm:$0xf]
    %v55 = vld [vmem:[%s3 + $0x58] sm:$0xf]
    %v56 = vld [vmem:[%s3 + $0x5c] sm:$0xf]
    %v57 = vld [vmem:[%s3 + $0x60] sm:$0xf]
    %v58 = vld [vmem:[%s3 + $0x64] sm:$0xf]
    %v59 = vld [vmem:[%s3 + $0x68] sm:$0xf]
    %v60 = vld [vmem:[%s3 + $0x6c] sm:$0xf]
    %v61 = vld [vmem:[%s3 + $0x70] sm:$0xf]
    %v62 = vld [vmem:[%s3 + $0x74] sm:$0xf]
    %v63 = vld [vmem:[%s3 + $0x78] sm:$0xf]
    %v64 = vld [vmem:[%s3 + $0x7c] sm:$0xf]
    %v65 = vld [vmem:[%s4] sm:$0x1]
    %v66 = vld [vmem:[%s5] sm:$0xf]
    %v67 = vld [vmem:[%s5 + $0x4] sm:$0xf]
    %v68 = vld [vmem:[%s5 + $0x8] sm:$0xf]
    %v69 = vld [vmem:[%s5 + $0xc] sm:$0xf]
    %v70 = vld [vmem:[%s5 + $0x10] sm:$0xf]
    %v71 = vld [vmem:[%s5 + $0x14] sm:$0xf]
    %v72 = vld [vmem:[%s5 + $0x18] sm:$0xf]
    %v73 = vld [vmem:[%s5 + $0x1c] sm:$0xf]
    %v74 = vld [vmem:[%s5 + $0x20] sm:$0xf]
    %v75 = vld [vmem:[%s5 + $0x24] sm:$0xf]
    %v76 = vld [vmem:[%s5 + $0x28] sm:$0xf]
    %v77 = vld [vmem:[%s5 + $0x2c] sm:$0xf]
    %v78 = vld [vmem:[%s5 + $0x30] sm:$0xf]
    %v79 = vld [vmem:[%s5 + $0x34] sm:$0xf]
    %v80 = vld [vmem:[%s5 + $0x38] sm:$0xf]
    %v81 = vld [vmem:[%s5 + $0x3c] sm:$0xf]
    %v82 = vld [vmem:[%s5 + $0x40] sm:$0xf]
    %v83 = vld [vmem:[%s5 + $0x44] sm:$0xf]
    %v84 = vld [vmem:[%s5 + $0x48] sm:$0xf]
    %v85 = vld [vmem:[%s5 + $0x4c] sm:$0xf]
    %v86 = vld [vmem:[%s5 + $0x50] sm:$0xf]
    %v87 = vld [vmem:[%s5 + $0x54] sm:$0xf]
    %v88 = vld [vmem:[%s5 + $0x58] sm:$0xf]
    %v89 = vld [vmem:[%s5 + $0x5c] sm:$0xf]
    %v90 = vld [vmem:[%s5 + $0x60] sm:$0xf]
    %v91 = vld [vmem:[%s5 + $0x64] sm:$0xf]
    %v92 = vld [vmem:[%s5 + $0x68] sm:$0xf]
    %v93 = vld [vmem:[%s5 + $0x6c] sm:$0xf]
    %v94 = vld [vmem:[%s5 + $0x70] sm:$0xf]
    %v95 = vld [vmem:[%s5 + $0x74] sm:$0xf]
    %v96 = vld [vmem:[%s5 + $0x78] sm:$0xf]
    %v97 = vld [vmem:[%s5 + $0x7c] sm:$0xf]
    %v98 = vld [vmem:[%s6] sm:$0x1]
    %v99 = vpack.c.bf16 %v31, %v31
    %v100 = vpack.c.bf16 %v30, %v30
    %v102 = vlaneseq
    %v103 = vshrl.u32 %v102, 7
    %v104 = vsub.s32 0, %v103
    %v105 = vrot.slane %v65, %v104
    %v139 = vunpack.c.l.b16 %v33
    %v140 = vunpack.c.l.b16 %v34
    %v141 = vunpack.c.l.b16 %v35
    %v142 = vunpack.c.l.b16 %v36
    %v143 = vunpack.c.l.b16 %v37
    %v144 = vunpack.c.l.b16 %v38
    %v145 = vunpack.c.l.b16 %v39
    %v146 = vunpack.c.l.b16 %v40
    %v147 = vunpack.c.l.b16 %v41
    %v148 = vunpack.c.l.b16 %v42
    %v149 = vunpack.c.l.b16 %v43
    %v150 = vunpack.c.l.b16 %v44
    %v151 = vunpack.c.l.b16 %v45
    %v152 = vunpack.c.l.b16 %v46
    %v153 = vunpack.c.l.b16 %v47
    %v154 = vunpack.c.l.b16 %v48
    %v155 = vunpack.c.l.b16 %v49
    %v156 = vunpack.c.l.b16 %v50
    %v157 = vunpack.c.l.b16 %v51
    %v158 = vunpack.c.l.b16 %v52
    %v159 = vunpack.c.l.b16 %v53
    %v160 = vunpack.c.l.b16 %v54
    %v161 = vunpack.c.l.b16 %v55
    %v162 = vunpack.c.l.b16 %v56
    %v163 = vunpack.c.l.b16 %v57
    %v164 = vunpack.c.l.b16 %v58
    %v165 = vunpack.c.l.b16 %v59
    %v166 = vunpack.c.l.b16 %v60
    %v167 = vunpack.c.l.b16 %v61
    %v168 = vunpack.c.l.b16 %v62
    %v169 = vunpack.c.l.b16 %v63
    %v170 = vunpack.c.l.b16 %v64
    %v171 = vpack.c.b16 %v140, %v139
    %v172 = vpack.c.b16 %v142, %v141
    %v173 = vpack.c.b16 %v144, %v143
    %v174 = vpack.c.b16 %v146, %v145
    %v175 = vpack.c.b16 %v148, %v147
    %v176 = vpack.c.b16 %v150, %v149
    %v177 = vpack.c.b16 %v152, %v151
    %v178 = vpack.c.b16 %v154, %v153
    %v179 = vpack.c.b16 %v156, %v155
    %v180 = vpack.c.b16 %v158, %v157
    %v181 = vpack.c.b16 %v160, %v159
    %v182 = vpack.c.b16 %v162, %v161
    %v183 = vpack.c.b16 %v164, %v163
    %v184 = vpack.c.b16 %v166, %v165
    %v185 = vpack.c.b16 %v168, %v167
    %v186 = vpack.c.b16 %v170, %v169
    %203 = vmatprep.subr.bf16.mxu0 0
    %204 = vmatpush1.bf16.msra.mxu0 %v178
    %205 = vmatprep.subr.bf16.mxu0 0
    %206 = vmatpush1.bf16.msra.mxu0 %v177
    %207 = vmatprep.subr.bf16.mxu0 0
    %208 = vmatpush1.bf16.msra.mxu0 %v176
    %209 = vmatprep.subr.bf16.mxu0 0
    %210 = vmatpush1.bf16.msra.mxu0 %v175
    %211 = vmatprep.subr.bf16.mxu0 0
    %212 = vmatpush1.bf16.msra.mxu0 %v174
    %213 = vmatprep.subr.bf16.mxu0 0
    %214 = vmatpush1.bf16.msra.mxu0 %v173
    %215 = vmatprep.subr.bf16.mxu0 0
    %216 = vmatpush1.bf16.msra.mxu0 %v172
    %217 = vmatprep.subr.bf16.mxu0 0
    %218 = vmatpush1.bf16.msra.mxu0 %v171
    %219 = vmatprep.subr.bf16.mxu0 0
    %220 = vmatpush2.bf16.msra.mxu0 %v186
    %221 = vmatprep.subr.bf16.mxu0 0
    %222 = vmatpush2.bf16.msra.mxu0 %v185
    %223 = vmatprep.subr.bf16.mxu0 0
    %224 = vmatpush2.bf16.msra.mxu0 %v184
    %225 = vmatprep.subr.bf16.mxu0 0
    %226 = vmatpush2.bf16.msra.mxu0 %v183
    %227 = vmatprep.subr.bf16.mxu0 0
    %228 = vmatpush2.bf16.msra.mxu0 %v182
    %229 = vmatprep.subr.bf16.mxu0 0
    %230 = vmatpush2.bf16.msra.mxu0 %v181
    %231 = vmatprep.subr.bf16.mxu0 0
    %232 = vmatpush2.bf16.msra.mxu0 %v180
    %233 = vmatprep.subr.bf16.mxu0 0
    %234 = vmatpush2.bf16.msra.mxu0 %v179
    %235 = vmatprep.mubr.bf16.mxu0 %v100
    %236 = vmatmul.mubr.bf16.gmra.mxu0 %v99
    %v237 = vpop.f32.mrf.mxu0
    %v238 = vadd.f32 %v105, %v237
    %v239 = vpop.f32.mrf.mxu0
    %v240 = vpop.f32.mrf.mxu0
    %v241 = vpop.f32.mrf.mxu0
    %242 = vdwg.mxu0
    %vm243 = vcmp.gt.f32.partialorder %v32, 0.0
    %245 = vrot.lane.b32.xlu0 %v238, 1
    %v246 = vpop.permute.xlu0 %245
    %v248 = vsel %vm243, %v246, -1e+30
    %vm249 = vcmask 7168
    %v250 = vsel %vm249, %v248, -inf
    %v251 = vrot.slane %v250, 4
    %v252 = vmax.f32 %v250, %v251
    %v253 = vrot.slane %v252, 2
    %v254 = vmax.f32 %v252, %v253
    %v255 = vrot.slane %v254, 1
    %v256 = vmax.f32 %v254, %v255
    %v257 = vsub.f32 %v248, %v256
    %v258 = vmul.f32 %v257, 1.442695
    %v259 = vpow.pop %v258
    %v260 = vmul.f32 %v259, %v32
    %v261 = vsel %vm249, %v260, 0.0
    %v262 = vrot.slane %v261, 4
    %v263 = vadd.f32 %v261, %v262
    %v264 = vrot.slane %v263, 2
    %v265 = vadd.f32 %v263, %v264
    %v266 = vrot.slane %v265, 1
    %v267 = vadd.f32 %v265, %v266
    %v268 = vrcp.pop %v267
    %v269 = vmul.f32 %v260, %v268
    %v270 = vmax.f32 %v238, 0.0
    %272 = vset.pattern.permute.xlu0 0
    %273 = vperm.xlu0 %272, %v269
    %v274 = vpop.permute.xlu0 %273
    %v276 = vmul.f32 %v274, %v270
    %v277 = vrot.slane %v276, 4
    %v278 = vadd.f32 %v276, %v277
    %v279 = vrot.slane %v278, 2
    %v280 = vadd.f32 %v278, %v279
    %v281 = vrot.slane %v280, 1
    %v282 = vadd.f32 %v280, %v281
    %v283 = vmul.f32 %v282, 0.125
    %v284 = vpack.c.bf16 %v30, %v31
    %v285 = vpack.c.bf16 %v283, %v276
    %v287 = vlaneseq
    %v288 = vshrl.u32 %v287, 7
    %v289 = vsub.s32 0, %v288
    %v290 = vrot.slane %v98, %v289
    %v324 = vunpack.c.l.b16 %v66
    %v325 = vunpack.c.l.b16 %v67
    %v326 = vunpack.c.l.b16 %v68
    %v327 = vunpack.c.l.b16 %v69
    %v328 = vunpack.c.l.b16 %v70
    %v329 = vunpack.c.l.b16 %v71
    %v330 = vunpack.c.l.b16 %v72
    %v331 = vunpack.c.l.b16 %v73
    %v332 = vunpack.c.l.b16 %v74
    %v333 = vunpack.c.l.b16 %v75
    %v334 = vunpack.c.l.b16 %v76
    %v335 = vunpack.c.l.b16 %v77
    %v336 = vunpack.c.l.b16 %v78
    %v337 = vunpack.c.l.b16 %v79
    %v338 = vunpack.c.l.b16 %v80
    %v339 = vunpack.c.l.b16 %v81
    %v340 = vunpack.c.l.b16 %v82
    %v341 = vunpack.c.l.b16 %v83
    %v342 = vunpack.c.l.b16 %v84
    %v343 = vunpack.c.l.b16 %v85
    %v344 = vunpack.c.l.b16 %v86
    %v345 = vunpack.c.l.b16 %v87
    %v346 = vunpack.c.l.b16 %v88
    %v347 = vunpack.c.l.b16 %v89
    %v348 = vunpack.c.l.b16 %v90
    %v349 = vunpack.c.l.b16 %v91
    %v350 = vunpack.c.l.b16 %v92
    %v351 = vunpack.c.l.b16 %v93
    %v352 = vunpack.c.l.b16 %v94
    %v353 = vunpack.c.l.b16 %v95
    %v354 = vunpack.c.l.b16 %v96
    %v355 = vunpack.c.l.b16 %v97
    %v356 = vpack.c.b16 %v325, %v324
    %v357 = vpack.c.b16 %v327, %v326
    %v358 = vpack.c.b16 %v329, %v328
    %v359 = vpack.c.b16 %v331, %v330
    %v360 = vpack.c.b16 %v333, %v332
    %v361 = vpack.c.b16 %v335, %v334
    %v362 = vpack.c.b16 %v337, %v336
    %v363 = vpack.c.b16 %v339, %v338
    %v364 = vpack.c.b16 %v341, %v340
    %v365 = vpack.c.b16 %v343, %v342
    %v366 = vpack.c.b16 %v345, %v344
    %v367 = vpack.c.b16 %v347, %v346
    %v368 = vpack.c.b16 %v349, %v348
    %v369 = vpack.c.b16 %v351, %v350
    %v370 = vpack.c.b16 %v353, %v352
    %v371 = vpack.c.b16 %v355, %v354
    %388 = vmatprep.subr.bf16.mxu0 0
    %389 = vmatpush1.bf16.msra.mxu0 %v363
    %390 = vmatprep.subr.bf16.mxu0 0
    %391 = vmatpush1.bf16.msra.mxu0 %v362
    %392 = vmatprep.subr.bf16.mxu0 0
    %393 = vmatpush1.bf16.msra.mxu0 %v361
    %394 = vmatprep.subr.bf16.mxu0 0
    %395 = vmatpush1.bf16.msra.mxu0 %v360
    %396 = vmatprep.subr.bf16.mxu0 0
    %397 = vmatpush1.bf16.msra.mxu0 %v359
    %398 = vmatprep.subr.bf16.mxu0 0
    %399 = vmatpush1.bf16.msra.mxu0 %v358
    %400 = vmatprep.subr.bf16.mxu0 0
    %401 = vmatpush1.bf16.msra.mxu0 %v357
    %402 = vmatprep.subr.bf16.mxu0 0
    %403 = vmatpush1.bf16.msra.mxu0 %v356
    %404 = vmatprep.subr.bf16.mxu0 0
    %405 = vmatpush2.bf16.msra.mxu0 %v371
    %406 = vmatprep.subr.bf16.mxu0 0
    %407 = vmatpush2.bf16.msra.mxu0 %v370
    %408 = vmatprep.subr.bf16.mxu0 0
    %409 = vmatpush2.bf16.msra.mxu0 %v369
    %410 = vmatprep.subr.bf16.mxu0 0
    %411 = vmatpush2.bf16.msra.mxu0 %v368
    %412 = vmatprep.subr.bf16.mxu0 0
    %413 = vmatpush2.bf16.msra.mxu0 %v367
    %414 = vmatprep.subr.bf16.mxu0 0
    %415 = vmatpush2.bf16.msra.mxu0 %v366
    %416 = vmatprep.subr.bf16.mxu0 0
    %417 = vmatpush2.bf16.msra.mxu0 %v365
    %418 = vmatprep.subr.bf16.mxu0 0
    %419 = vmatpush2.bf16.msra.mxu0 %v364
    %420 = vmatprep.mubr.bf16.mxu0 %v285
    %421 = vmatmul.mubr.bf16.gmra.mxu0 %v284
    %v422 = vpop.f32.mrf.mxu0
    %v423 = vadd.f32 %v290, %v422
    %v424 = vpop.f32.mrf.mxu0
    %v425 = vpop.f32.mrf.mxu0
    %v426 = vadd.f32 %v290, %v425
    %v427 = vpop.f32.mrf.mxu0
    %428 = vdwg.mxu0
    %v429 = vmax.f32 %v423, 0.0
    %v430 = vmax.f32 %v426, 0.0
    %v431 = vadd.f32 %v429, %v31
    %433 = vset.pattern.permute.xlu0 0
    %434 = vperm.xlu0 %433, %v32
    %v435 = vpop.permute.xlu0 %434
    %v437 = vmul.f32 %v431, %v435
    %s438 = scalar_lea.vmem %s3, 128
    %v439 = vld [vmem:[%s438] sm:$0xf]
    %v440 = vld [vmem:[%s438 + $0x4] sm:$0xf]
    %v441 = vld [vmem:[%s438 + $0x8] sm:$0xf]
    %v442 = vld [vmem:[%s438 + $0xc] sm:$0xf]
    %v443 = vld [vmem:[%s438 + $0x10] sm:$0xf]
    %v444 = vld [vmem:[%s438 + $0x14] sm:$0xf]
    %v445 = vld [vmem:[%s438 + $0x18] sm:$0xf]
    %v446 = vld [vmem:[%s438 + $0x1c] sm:$0xf]
    %v447 = vld [vmem:[%s438 + $0x20] sm:$0xf]
    %v448 = vld [vmem:[%s438 + $0x24] sm:$0xf]
    %v449 = vld [vmem:[%s438 + $0x28] sm:$0xf]
    %v450 = vld [vmem:[%s438 + $0x2c] sm:$0xf]
    %v451 = vld [vmem:[%s438 + $0x30] sm:$0xf]
    %v452 = vld [vmem:[%s438 + $0x34] sm:$0xf]
    %v453 = vld [vmem:[%s438 + $0x38] sm:$0xf]
    %v454 = vld [vmem:[%s438 + $0x3c] sm:$0xf]
    %v455 = vld [vmem:[%s438 + $0x40] sm:$0xf]
    %v456 = vld [vmem:[%s438 + $0x44] sm:$0xf]
    %v457 = vld [vmem:[%s438 + $0x48] sm:$0xf]
    %v458 = vld [vmem:[%s438 + $0x4c] sm:$0xf]
    %v459 = vld [vmem:[%s438 + $0x50] sm:$0xf]
    %v460 = vld [vmem:[%s438 + $0x54] sm:$0xf]
    %v461 = vld [vmem:[%s438 + $0x58] sm:$0xf]
    %v462 = vld [vmem:[%s438 + $0x5c] sm:$0xf]
    %v463 = vld [vmem:[%s438 + $0x60] sm:$0xf]
    %v464 = vld [vmem:[%s438 + $0x64] sm:$0xf]
    %v465 = vld [vmem:[%s438 + $0x68] sm:$0xf]
    %v466 = vld [vmem:[%s438 + $0x6c] sm:$0xf]
    %v467 = vld [vmem:[%s438 + $0x70] sm:$0xf]
    %v468 = vld [vmem:[%s438 + $0x74] sm:$0xf]
    %v469 = vld [vmem:[%s438 + $0x78] sm:$0xf]
    %v470 = vld [vmem:[%s438 + $0x7c] sm:$0xf]
    %s471 = scalar_lea.vmem %s4, 1
    %v472 = vld [vmem:[%s471] sm:$0x1]
    %s473 = scalar_lea.vmem %s5, 128
    %v474 = vld [vmem:[%s473] sm:$0xf]
    %v475 = vld [vmem:[%s473 + $0x4] sm:$0xf]
    %v476 = vld [vmem:[%s473 + $0x8] sm:$0xf]
    %v477 = vld [vmem:[%s473 + $0xc] sm:$0xf]
    %v478 = vld [vmem:[%s473 + $0x10] sm:$0xf]
    %v479 = vld [vmem:[%s473 + $0x14] sm:$0xf]
    %v480 = vld [vmem:[%s473 + $0x18] sm:$0xf]
    %v481 = vld [vmem:[%s473 + $0x1c] sm:$0xf]
    %v482 = vld [vmem:[%s473 + $0x20] sm:$0xf]
    %v483 = vld [vmem:[%s473 + $0x24] sm:$0xf]
    %v484 = vld [vmem:[%s473 + $0x28] sm:$0xf]
    %v485 = vld [vmem:[%s473 + $0x2c] sm:$0xf]
    %v486 = vld [vmem:[%s473 + $0x30] sm:$0xf]
    %v487 = vld [vmem:[%s473 + $0x34] sm:$0xf]
    %v488 = vld [vmem:[%s473 + $0x38] sm:$0xf]
    %v489 = vld [vmem:[%s473 + $0x3c] sm:$0xf]
    %v490 = vld [vmem:[%s473 + $0x40] sm:$0xf]
    %v491 = vld [vmem:[%s473 + $0x44] sm:$0xf]
    %v492 = vld [vmem:[%s473 + $0x48] sm:$0xf]
    %v493 = vld [vmem:[%s473 + $0x4c] sm:$0xf]
    %v494 = vld [vmem:[%s473 + $0x50] sm:$0xf]
    %v495 = vld [vmem:[%s473 + $0x54] sm:$0xf]
    %v496 = vld [vmem:[%s473 + $0x58] sm:$0xf]
    %v497 = vld [vmem:[%s473 + $0x5c] sm:$0xf]
    %v498 = vld [vmem:[%s473 + $0x60] sm:$0xf]
    %v499 = vld [vmem:[%s473 + $0x64] sm:$0xf]
    %v500 = vld [vmem:[%s473 + $0x68] sm:$0xf]
    %v501 = vld [vmem:[%s473 + $0x6c] sm:$0xf]
    %v502 = vld [vmem:[%s473 + $0x70] sm:$0xf]
    %v503 = vld [vmem:[%s473 + $0x74] sm:$0xf]
    %v504 = vld [vmem:[%s473 + $0x78] sm:$0xf]
    %v505 = vld [vmem:[%s473 + $0x7c] sm:$0xf]
    %s506 = scalar_lea.vmem %s6, 1
    %v507 = vld [vmem:[%s506] sm:$0x1]
    %v508 = vpack.c.bf16 %v437, %v437
    %v509 = vpack.c.bf16 %v430, %v430
    %v511 = vlaneseq
    %v512 = vshrl.u32 %v511, 7
    %v513 = vsub.s32 0, %v512
    %v514 = vrot.slane %v472, %v513
    %v548 = vunpack.c.l.b16 %v439
    %v549 = vunpack.c.l.b16 %v440
    %v550 = vunpack.c.l.b16 %v441
    %v551 = vunpack.c.l.b16 %v442
    %v552 = vunpack.c.l.b16 %v443
    %v553 = vunpack.c.l.b16 %v444
    %v554 = vunpack.c.l.b16 %v445
    %v555 = vunpack.c.l.b16 %v446
    %v556 = vunpack.c.l.b16 %v447
    %v557 = vunpack.c.l.b16 %v448
    %v558 = vunpack.c.l.b16 %v449
    %v559 = vunpack.c.l.b16 %v450
    %v560 = vunpack.c.l.b16 %v451
    %v561 = vunpack.c.l.b16 %v452
    %v562 = vunpack.c.l.b16 %v453
    %v563 = vunpack.c.l.b16 %v454
    %v564 = vunpack.c.l.b16 %v455
    %v565 = vunpack.c.l.b16 %v456
    %v566 = vunpack.c.l.b16 %v457
    %v567 = vunpack.c.l.b16 %v458
    %v568 = vunpack.c.l.b16 %v459
    %v569 = vunpack.c.l.b16 %v460
    %v570 = vunpack.c.l.b16 %v461
    %v571 = vunpack.c.l.b16 %v462
    %v572 = vunpack.c.l.b16 %v463
    %v573 = vunpack.c.l.b16 %v464
    %v574 = vunpack.c.l.b16 %v465
    %v575 = vunpack.c.l.b16 %v466
    %v576 = vunpack.c.l.b16 %v467
    %v577 = vunpack.c.l.b16 %v468
    %v578 = vunpack.c.l.b16 %v469
    %v579 = vunpack.c.l.b16 %v470
    %v580 = vpack.c.b16 %v549, %v548
    %v581 = vpack.c.b16 %v551, %v550
    %v582 = vpack.c.b16 %v553, %v552
    %v583 = vpack.c.b16 %v555, %v554
    %v584 = vpack.c.b16 %v557, %v556
    %v585 = vpack.c.b16 %v559, %v558
    %v586 = vpack.c.b16 %v561, %v560
    %v587 = vpack.c.b16 %v563, %v562
    %v588 = vpack.c.b16 %v565, %v564
    %v589 = vpack.c.b16 %v567, %v566
    %v590 = vpack.c.b16 %v569, %v568
    %v591 = vpack.c.b16 %v571, %v570
    %v592 = vpack.c.b16 %v573, %v572
    %v593 = vpack.c.b16 %v575, %v574
    %v594 = vpack.c.b16 %v577, %v576
    %v595 = vpack.c.b16 %v579, %v578
    %612 = vmatprep.subr.bf16.mxu0 0
    %613 = vmatpush1.bf16.msra.mxu0 %v587
    %614 = vmatprep.subr.bf16.mxu0 0
    %615 = vmatpush1.bf16.msra.mxu0 %v586
    %616 = vmatprep.subr.bf16.mxu0 0
    %617 = vmatpush1.bf16.msra.mxu0 %v585
    %618 = vmatprep.subr.bf16.mxu0 0
    %619 = vmatpush1.bf16.msra.mxu0 %v584
    %620 = vmatprep.subr.bf16.mxu0 0
    %621 = vmatpush1.bf16.msra.mxu0 %v583
    %622 = vmatprep.subr.bf16.mxu0 0
    %623 = vmatpush1.bf16.msra.mxu0 %v582
    %624 = vmatprep.subr.bf16.mxu0 0
    %625 = vmatpush1.bf16.msra.mxu0 %v581
    %626 = vmatprep.subr.bf16.mxu0 0
    %627 = vmatpush1.bf16.msra.mxu0 %v580
    %628 = vmatprep.subr.bf16.mxu0 0
    %629 = vmatpush2.bf16.msra.mxu0 %v595
    %630 = vmatprep.subr.bf16.mxu0 0
    %631 = vmatpush2.bf16.msra.mxu0 %v594
    %632 = vmatprep.subr.bf16.mxu0 0
    %633 = vmatpush2.bf16.msra.mxu0 %v593
    %634 = vmatprep.subr.bf16.mxu0 0
    %635 = vmatpush2.bf16.msra.mxu0 %v592
    %636 = vmatprep.subr.bf16.mxu0 0
    %637 = vmatpush2.bf16.msra.mxu0 %v591
    %638 = vmatprep.subr.bf16.mxu0 0
    %639 = vmatpush2.bf16.msra.mxu0 %v590
    %640 = vmatprep.subr.bf16.mxu0 0
    %641 = vmatpush2.bf16.msra.mxu0 %v589
    %642 = vmatprep.subr.bf16.mxu0 0
    %643 = vmatpush2.bf16.msra.mxu0 %v588
    %644 = vmatprep.mubr.bf16.mxu0 %v509
    %645 = vmatmul.mubr.bf16.gmra.mxu0 %v508
    %v646 = vpop.f32.mrf.mxu0
    %v647 = vadd.f32 %v514, %v646
    %v648 = vpop.f32.mrf.mxu0
    %v649 = vpop.f32.mrf.mxu0
    %v650 = vpop.f32.mrf.mxu0
    %651 = vdwg.mxu0
    %653 = vrot.lane.b32.xlu0 %v647, 1
    %v654 = vpop.permute.xlu0 %653
    %v656 = vsel %vm243, %v654, -1e+30
    %v657 = vsel %vm249, %v656, -inf
    %v658 = vrot.slane %v657, 4
    %v659 = vmax.f32 %v657, %v658
    %v660 = vrot.slane %v659, 2
    %v661 = vmax.f32 %v659, %v660
    %v662 = vrot.slane %v661, 1
    %v663 = vmax.f32 %v661, %v662
    %v664 = vsub.f32 %v656, %v663
    %v665 = vmul.f32 %v664, 1.442695
    %v666 = vpow.pop %v665
    %v667 = vmul.f32 %v666, %v32
    %v668 = vsel %vm249, %v667, 0.0
    %v669 = vrot.slane %v668, 4
    %v670 = vadd.f32 %v668, %v669
    %v671 = vrot.slane %v670, 2
    %v672 = vadd.f32 %v670, %v671
    %v673 = vrot.slane %v672, 1
    %v674 = vadd.f32 %v672, %v673
    %v675 = vrcp.pop %v674
    %v676 = vmul.f32 %v667, %v675
    %v677 = vmax.f32 %v647, 0.0
    %679 = vset.pattern.permute.xlu0 0
    %680 = vperm.xlu0 %679, %v676
    %v681 = vpop.permute.xlu0 %680
    %v683 = vmul.f32 %v681, %v677
    %v684 = vrot.slane %v683, 4
    %v685 = vadd.f32 %v683, %v684
    %v686 = vrot.slane %v685, 2
    %v687 = vadd.f32 %v685, %v686
    %v688 = vrot.slane %v687, 1
    %v689 = vadd.f32 %v687, %v688
    %v690 = vmul.f32 %v689, 0.125
    %v691 = vpack.c.bf16 %v430, %v437
    %v692 = vpack.c.bf16 %v690, %v683
    %v694 = vlaneseq
    %v695 = vshrl.u32 %v694, 7
    %v696 = vsub.s32 0, %v695
    %v697 = vrot.slane %v507, %v696
    %v731 = vunpack.c.l.b16 %v474
    %v732 = vunpack.c.l.b16 %v475
    %v733 = vunpack.c.l.b16 %v476
    %v734 = vunpack.c.l.b16 %v477
    %v735 = vunpack.c.l.b16 %v478
    %v736 = vunpack.c.l.b16 %v479
    %v737 = vunpack.c.l.b16 %v480
    %v738 = vunpack.c.l.b16 %v481
    %v739 = vunpack.c.l.b16 %v482
    %v740 = vunpack.c.l.b16 %v483
    %v741 = vunpack.c.l.b16 %v484
    %v742 = vunpack.c.l.b16 %v485
    %v743 = vunpack.c.l.b16 %v486
    %v744 = vunpack.c.l.b16 %v487
    %v745 = vunpack.c.l.b16 %v488
    %v746 = vunpack.c.l.b16 %v489
    %v747 = vunpack.c.l.b16 %v490
    %v748 = vunpack.c.l.b16 %v491
    %v749 = vunpack.c.l.b16 %v492
    %v750 = vunpack.c.l.b16 %v493
    %v751 = vunpack.c.l.b16 %v494
    %v752 = vunpack.c.l.b16 %v495
    %v753 = vunpack.c.l.b16 %v496
    %v754 = vunpack.c.l.b16 %v497
    %v755 = vunpack.c.l.b16 %v498
    %v756 = vunpack.c.l.b16 %v499
    %v757 = vunpack.c.l.b16 %v500
    %v758 = vunpack.c.l.b16 %v501
    %v759 = vunpack.c.l.b16 %v502
    %v760 = vunpack.c.l.b16 %v503
    %v761 = vunpack.c.l.b16 %v504
    %v762 = vunpack.c.l.b16 %v505
    %v763 = vpack.c.b16 %v732, %v731
    %v764 = vpack.c.b16 %v734, %v733
    %v765 = vpack.c.b16 %v736, %v735
    %v766 = vpack.c.b16 %v738, %v737
    %v767 = vpack.c.b16 %v740, %v739
    %v768 = vpack.c.b16 %v742, %v741
    %v769 = vpack.c.b16 %v744, %v743
    %v770 = vpack.c.b16 %v746, %v745
    %v771 = vpack.c.b16 %v748, %v747
    %v772 = vpack.c.b16 %v750, %v749
    %v773 = vpack.c.b16 %v752, %v751
    %v774 = vpack.c.b16 %v754, %v753
    %v775 = vpack.c.b16 %v756, %v755
    %v776 = vpack.c.b16 %v758, %v757
    %v777 = vpack.c.b16 %v760, %v759
    %v778 = vpack.c.b16 %v762, %v761
    %795 = vmatprep.subr.bf16.mxu0 0
    %796 = vmatpush1.bf16.msra.mxu0 %v770
    %797 = vmatprep.subr.bf16.mxu0 0
    %798 = vmatpush1.bf16.msra.mxu0 %v769
    %799 = vmatprep.subr.bf16.mxu0 0
    %800 = vmatpush1.bf16.msra.mxu0 %v768
    %801 = vmatprep.subr.bf16.mxu0 0
    %802 = vmatpush1.bf16.msra.mxu0 %v767
    %803 = vmatprep.subr.bf16.mxu0 0
    %804 = vmatpush1.bf16.msra.mxu0 %v766
    %805 = vmatprep.subr.bf16.mxu0 0
    %806 = vmatpush1.bf16.msra.mxu0 %v765
    %807 = vmatprep.subr.bf16.mxu0 0
    %808 = vmatpush1.bf16.msra.mxu0 %v764
    %809 = vmatprep.subr.bf16.mxu0 0
    %810 = vmatpush1.bf16.msra.mxu0 %v763
    %811 = vmatprep.subr.bf16.mxu0 0
    %812 = vmatpush2.bf16.msra.mxu0 %v778
    %813 = vmatprep.subr.bf16.mxu0 0
    %814 = vmatpush2.bf16.msra.mxu0 %v777
    %815 = vmatprep.subr.bf16.mxu0 0
    %816 = vmatpush2.bf16.msra.mxu0 %v776
    %817 = vmatprep.subr.bf16.mxu0 0
    %818 = vmatpush2.bf16.msra.mxu0 %v775
    %819 = vmatprep.subr.bf16.mxu0 0
    %820 = vmatpush2.bf16.msra.mxu0 %v774
    %821 = vmatprep.subr.bf16.mxu0 0
    %822 = vmatpush2.bf16.msra.mxu0 %v773
    %823 = vmatprep.subr.bf16.mxu0 0
    %824 = vmatpush2.bf16.msra.mxu0 %v772
    %825 = vmatprep.subr.bf16.mxu0 0
    %826 = vmatpush2.bf16.msra.mxu0 %v771
    %827 = vmatprep.mubr.bf16.mxu0 %v692
    %828 = vmatmul.mubr.bf16.gmra.mxu0 %v691
    %v829 = vpop.f32.mrf.mxu0
    %v830 = vadd.f32 %v697, %v829
    %v831 = vpop.f32.mrf.mxu0
    %v832 = vpop.f32.mrf.mxu0
    %v833 = vadd.f32 %v697, %v832
    %v834 = vpop.f32.mrf.mxu0
    %835 = vdwg.mxu0
    %v836 = vmax.f32 %v830, 0.0
    %v837 = vmax.f32 %v833, 0.0
    %v838 = vadd.f32 %v836, %v437
    %v839 = vmul.f32 %v838, %v435
    %840 = vst [vmem:[%s7] sm:$0xff] %v837
    %841 = vst [vmem:[#allocation2] sm:$0xff] %v839
    // Predicated region
    $region30: #{multi_layer_hetero_gnn.1} parent=1 // pred_check
      _
    $region31: #{multi_layer_hetero_gnn.1} parent=1 // pred_check_branch
      %843 = sbr.rel (0) target = $region33
    $region32: #{multi_layer_hetero_gnn.1} parent=1 // pred_region
      _
    $region33: #{multi_layer_hetero_gnn.1} parent=1 // pred_fallthru
      _
    // Predicated region
    $region34: #{multi_layer_hetero_gnn.1} parent=1 // pred_check
      _
    $region35: #{multi_layer_hetero_gnn.1} parent=1 // pred_check_branch
      %845 = sbr.rel (0) target = $region37
    $region36: #{multi_layer_hetero_gnn.1} parent=1 // pred_region
      %s847 = ssub.s32 128, 128
      %848 = vsyncadd [#allocation3], %s847
      %s850 = sshll.u32 [#allocation2], 4
      %s851 = int_to_ptr.vmem [resolvable:$true] %s850
      %853 = dma.vmem_to_hbm [thread:$0]  %s851, 128, %s8, [#allocation3]
    $region37: #{multi_layer_hetero_gnn.1} parent=1 // pred_fallthru
      _
    // Predicated region
    $region38: #{multi_layer_hetero_gnn.1} parent=1 // pred_check
      _
    $region39: #{multi_layer_hetero_gnn.1} parent=1 // pred_check_branch
      %855 = sbr.rel (0) target = $region41
    $region40: #{multi_layer_hetero_gnn.1} parent=1 // pred_region
      _
    $region41: #{multi_layer_hetero_gnn.1} parent=1 // pred_fallthru
      _
    // Predicated region
    $region42: #{multi_layer_hetero_gnn.1} parent=1 // pred_check
      _
    $region43: #{multi_layer_hetero_gnn.1} parent=1 // pred_check_branch
      %857 = sbr.rel (0) target = $region45
    $region44: #{multi_layer_hetero_gnn.1} parent=1 // pred_region
      %858 = dma.done [#allocation3], 128
    $region45: #{multi_layer_hetero_gnn.1} parent=1 // pred_fallthru
      _
    %859 = vsyncpa [#allocation3], 1

</llo_original>
